<compile_context>
chip_gen: v6e
topology: v6e:2x2x1
jax: 0.10.0
libtpu: 0.0.40
codegen_flags: <defaults>
</compile_context>

<pallas_src>
import math

import jax
import jax.numpy as jnp
from jax.experimental import pallas as pl
from jax.experimental.pallas import tpu as pltpu

_LANE = 128
_SUBLANE = 8


def _round_up(x, m):
    return (x + m - 1) // m * m


def _cdiv(a, b):
    return -(-a // b)


def _tensorcores_per_chip():
    """2 on v7x (dual TensorCore), else 1.  Used only for perf heuristics."""
    try:
        kind = jax.devices()[0].device_kind.lower()
        return 2 if "v7" in kind else 1
    except Exception:  # pragma: no cover - heuristics only
        return 1


# ----------------------------------------------------------------------------
# Pallas kernels
# ----------------------------------------------------------------------------
def _gemm_bias_kernel(p_ref, w_ref, b_ref, o_ref):
    """Single-K-step GEMM + bias.  No accumulator scratch, single store."""
    o_ref[...] = (jnp.dot(p_ref[...], w_ref[...],
                          preferred_element_type=jnp.float32)
                  + b_ref[...]).astype(o_ref.dtype)


def _gemm_bias_acc_kernel(p_ref, w_ref, b_ref, o_ref, acc_ref):
    """Multi-K-step GEMM.  Bias folded into acc init -> single-store epilogue."""
    k = pl.program_id(2)

    @pl.when(k == 0)
    def _init():
        acc_ref[...] = jnp.broadcast_to(b_ref[...], acc_ref.shape).astype(jnp.float32)

    acc_ref[...] += jnp.dot(p_ref[...], w_ref[...],
                            preferred_element_type=jnp.float32)

    @pl.when(k == pl.num_programs(2) - 1)
    def _finalize():
        o_ref[...] = acc_ref[...].astype(o_ref.dtype)


# ----------------------------------------------------------------------------
# Wrapper glue: im2col, Bayesian sampling (once), tiling, padding.
# ----------------------------------------------------------------------------
def _im2col(x_nchw, KH, KW, sh, sw, ph, pw, dh, dw):
    """NCHW -> (N*OH*OW, KH*KW*Cin) patches, K order (kh, kw) major / Cin minor.

    Built with a concatenate of C-contiguous NHWC slabs (far cheaper than an
    interleaving stack+reshape); the matching reorder goes on the tiny weight.
    """
    N, C, H, W = x_nchw.shape
    OH = (H + 2 * ph - dh * (KH - 1) - 1) // sh + 1
    OW = (W + 2 * pw - dw * (KW - 1) - 1) // sw + 1
    x = jnp.transpose(x_nchw, (0, 2, 3, 1))                        # NHWC (small)
    if ph or pw:
        x = jnp.pad(x, ((0, 0), (ph, ph), (pw, pw), (0, 0)))
    cols = []
    for kh in range(KH):
        for kw in range(KW):
            cols.append(x[:, kh * dh: kh * dh + sh * (OH - 1) + 1: sh,
                             kw * dw: kw * dw + sw * (OW - 1) + 1: sw, :])
    patches = jnp.concatenate(cols, axis=-1).reshape(N * OH * OW, KH * KW * C)
    return patches, OH, OW


def _choose_tiles(M, K, OC, in_itemsize, two_tc):
    """Return (Mp, Kp, OCp, tm, tk, tn, multi_k) with minimal zero-padding."""
    # OC (lane) tile: pad to 128 only; tn = 256 when it divides OCp (MXU width).
    OCp = _round_up(OC, _LANE)
    if OCp <= 256:
        tn = OCp
    elif OCp % 256 == 0:
        tn = 256
    else:
        tn = 128

    # K: single full-extent K block (no padding, no accumulator) when modest.
    if K <= 2048:
        Kp, tk, multi_k = K, K, False
    else:
        Kp = _round_up(K, _LANE)
        tk = next(t for t in (512, 384, 256, 128) if Kp % t == 0)
        multi_k = True

    # M (sublane) tile: as large as a ~24 MiB double-buffer budget allows
    # (per-grid-step overhead ~0.35us; big tiles approach the HBM roofline).
    budget = 24 * 1024 * 1024
    fixed = 2 * tk * tn * in_itemsize + 2 * tn * 4
    per_tm = 2 * tk * in_itemsize + 2 * tn * 4 + (tn * 4 if multi_k else 0)
    tm = min(2048, max(_SUBLANE, (budget - fixed) // per_tm))
    tm = max(_SUBLANE, (tm // _SUBLANE) * _SUBLANE)

    if M <= tm:
        tm, Mp = M, M                     # full-extent block: no M padding
    else:
        Mp = _round_up(M, tm)

    # v7x only (2 TensorCores): ensure >= 2 parallel output tiles so both cores
    # get work; on v5e/v6e (1 TC) this would only add a grid step.
    if two_tc and (Mp // tm) * (OCp // tn) == 1 and M > _SUBLANE:
        tm = _round_up(_cdiv(M, 2), _SUBLANE)
        Mp = 2 * tm

    return Mp, Kp, OCp, tm, tk, tn, multi_k


def bayes_conv2d_forward(x, params, eps, *, stride=(1, 1), padding=(0, 0),
                         dilation=(1, 1), use_bf16_operands=False,
                         out_layout="NCHW"):
    """Forward of BayesConv2d. x: (N, Cin, H, W) float32 (NCHW)."""
    w_mu, w_ls, b_mu, b_ls = params
    w_eps, b_eps = eps
    OC, Cin, KH, KW = w_mu.shape
    N = x.shape[0]
    sh, sw = stride
    ph, pw = padding
    dh, dw = dilation
    K = Cin * KH * KW

    in_dtype = jnp.bfloat16 if use_bf16_operands else jnp.float32
    in_itemsize = 2 if use_bf16_operands else 4

    # --- Bayesian sampling: ONE fused XLA elementwise op over O(K*OC) elems ---
    w = w_mu + jnp.exp(w_ls) * w_eps                               # (OC,Cin,KH,KW)
    # K order (kh, kw, cin) to match the concatenate-built patches.
    w = jnp.transpose(w, (2, 3, 1, 0)).reshape(K, OC).astype(in_dtype)
    if b_mu is None:
        b = jnp.zeros((OC,), jnp.float32)
    else:
        b = (b_mu + jnp.exp(b_ls) * b_eps).astype(jnp.float32)

    # --- im2col (layout plumbing) ---
    patches, OH, OW = _im2col(x, KH, KW, sh, sw, ph, pw, dh, dw)   # (M, K)
    M = N * OH * OW

    two_tc = _tensorcores_per_chip() == 2
    Mp, Kp, OCp, tm, tk, tn, multi_k = _choose_tiles(M, K, OC, in_itemsize, two_tc)

    patches = patches.astype(in_dtype)
    if Mp != M or Kp != K:
        patches = jnp.pad(patches, ((0, Mp - M), (0, Kp - K)))
    if Kp != K or OCp != OC:
        w = jnp.pad(w, ((0, Kp - K), (0, OCp - OC)))               # padded rows/cols = 0
    b = (jnp.pad(b, (0, OCp - OC)) if OCp != OC else b).reshape(1, OCp)

    # --- VMEM budget / cost hints ---
    acc_bytes = tm * tn * 4 if multi_k else 0
    vmem_need = (2 * (tm * tk + tk * tn) * in_itemsize + 2 * tn * 4
                 + 2 * tm * tn * 4 + acc_bytes)
    vmem_cap = (48 if two_tc else 64) * 1024 * 1024                # v7x: headroom
    vmem_limit = int(min(max(2 * vmem_need, 32 * 1024 * 1024), vmem_cap))

    cost = pl.CostEstimate(
        flops=2 * M * K * OC,
        transcendentals=0,
        bytes_accessed=(Mp * Kp * (OCp // tn) + Kp * OCp * (Mp // tm)) * in_itemsize
                       + Mp * OCp * 4,
    )

    if multi_k:
        grid = (Mp // tm, OCp // tn, Kp // tk)
        out_p = pl.pallas_call(
            _gemm_bias_acc_kernel,
            out_shape=jax.ShapeDtypeStruct((Mp, OCp), jnp.float32),
            grid_spec=pltpu.PrefetchScalarGridSpec(
                num_scalar_prefetch=0,
                grid=grid,
                in_specs=[
                    pl.BlockSpec((tm, tk), lambda i, j, k: (i, k)),   # patches tile
                    pl.BlockSpec((tk, tn), lambda i, j, k: (k, j)),   # weight tile
                    pl.BlockSpec((1, tn), lambda i, j, k: (0, j)),    # bias tile
                ],
                out_specs=pl.BlockSpec((tm, tn), lambda i, j, k: (i, j)),
                scratch_shapes=[pltpu.VMEM((tm, tn), jnp.float32)],
            ),
            compiler_params=pltpu.CompilerParams(
                dimension_semantics=("parallel", "parallel", "arbitrary"),
                vmem_limit_bytes=vmem_limit),
            cost_estimate=cost,
        )(patches, w, b)
    else:
        grid = (Mp // tm, OCp // tn)
        out_p = pl.pallas_call(
            _gemm_bias_kernel,
            out_shape=jax.ShapeDtypeStruct((Mp, OCp), jnp.float32),
            grid_spec=pltpu.PrefetchScalarGridSpec(
                num_scalar_prefetch=0,
                grid=grid,
                in_specs=[
                    pl.BlockSpec((tm, Kp), lambda i, j: (i, 0)),      # patches tile
                    pl.BlockSpec((Kp, tn), lambda i, j: (0, j)),      # weight tile
                    pl.BlockSpec((1, tn), lambda i, j: (0, j)),       # bias tile
                ],
                out_specs=pl.BlockSpec((tm, tn), lambda i, j: (i, j)),
            ),
            compiler_params=pltpu.CompilerParams(
                dimension_semantics=("parallel", "parallel"),
                vmem_limit_bytes=vmem_limit),
            cost_estimate=cost,
        )(patches, w, b)

    # Epilogue: slice away padding, reshape; NHWC output skips the transpose.
    out = out_p[:M, :OC].reshape(N, OH, OW, OC)
    if out_layout == "NHWC":
        return out
    return jnp.transpose(out, (0, 3, 1, 2))                        # NCHW


# ----------------------------------------------------------------------------
# Deterministic parameter init mirroring _BayesConvNd.reset_parameters().
# ----------------------------------------------------------------------------
def init_bayes_conv2d_params(key, prior_sigma, in_channels, out_channels,
                             kernel_size):
    KH, KW = kernel_size
    # NOTE: faithful to the PyTorch module: n = in_channels * kernel_size[0]**2
    # (kernel_size[0] is used twice -- an intentional quirk of the original).
    n = in_channels * KH * KH
    stdv = 1.0 / math.sqrt(n)
    k1, k2 = jax.random.split(key)
    w_mu = jax.random.uniform(k1, (out_channels, in_channels, KH, KW),
                              jnp.float32, -stdv, stdv)
    w_ls = jnp.full((out_channels, in_channels, KH, KW),
                    math.log(prior_sigma), jnp.float32)
    b_mu = jax.random.uniform(k2, (out_channels,), jnp.float32, -stdv, stdv)
    b_ls = jnp.full((out_channels,), math.log(prior_sigma), jnp.float32)
    return w_mu, w_ls, b_mu, b_ls


def _reference(x, params, eps, stride, padding, dilation):
    w_mu, w_ls, b_mu, b_ls = params
    w_eps, b_eps = eps
    w = w_mu + jnp.exp(w_ls) * w_eps
    b = b_mu + jnp.exp(b_ls) * b_eps
    out = jax.lax.conv_general_dilated(
        x, w, window_strides=stride,
        padding=[(padding[0], padding[0]), (padding[1], padding[1])],
        rhs_dilation=dilation,
        dimension_numbers=("NCHW", "OIHW", "NCHW"))
    return out + b[None, :, None, None]


if __name__ == "__main__":
    key = jax.random.PRNGKey(0)
    prior_sigma = 0.1

    # Case 1: BayesConv2d(0.0, 0.1, 4, 8, kernel_size=3, stride=1, padding=1)
    k_x, k_p, k_we, k_be, key = jax.random.split(key, 5)
    Cin, Cout, ksize = 4, 8, (3, 3)
    stride, padding, dilation = (1, 1), (1, 1), (1, 1)
    x = jax.random.normal(k_x, (2, Cin, 16, 16), jnp.float32)              # NCHW
    params = init_bayes_conv2d_params(k_p, prior_sigma, Cin, Cout, ksize)
    w_eps = jax.random.normal(k_we, params[0].shape, jnp.float32)          # torch.randn_like
    b_eps = jax.random.normal(k_be, params[2].shape, jnp.float32)
    out = bayes_conv2d_forward(x, params, (w_eps, b_eps), stride=stride,
                               padding=padding, dilation=dilation)
    out = jax.block_until_ready(out)
    ref = _reference(x, params, (w_eps, b_eps), stride, padding, dilation)
    assert out.shape == (2, Cout, 16, 16), out.shape
    err = float(jnp.max(jnp.abs(out - ref)))
    assert err < 1e-4, err

    # Case 2: stride=2, dilation=2, padding=0 (generic tiling / odd-M path).
    k_x, k_p, k_we, k_be, key = jax.random.split(key, 5)
    Cin2, Cout2, ksize2 = 3, 5, (3, 3)
    stride2, padding2, dilation2 = (2, 2), (0, 0), (2, 2)
    x2 = jax.random.normal(k_x, (2, Cin2, 17, 17), jnp.float32)
    params2 = init_bayes_conv2d_params(k_p, prior_sigma, Cin2, Cout2, ksize2)
    w_eps2 = jax.random.normal(k_we, params2[0].shape, jnp.float32)
    b_eps2 = jax.random.normal(k_be, params2[2].shape, jnp.float32)
    out2 = bayes_conv2d_forward(x2, params2, (w_eps2, b_eps2), stride=stride2,
                                padding=padding2, dilation=dilation2)
    out2 = jax.block_until_ready(out2)
    ref2 = _reference(x2, params2, (w_eps2, b_eps2), stride2, padding2, dilation2)
    assert out2.shape == ref2.shape, (out2.shape, ref2.shape)
    err2 = float(jnp.max(jnp.abs(out2 - ref2)))
    assert err2 < 1e-4, err2

    print("KERNEL_OK")
</pallas_src>

<mosaic_0001>
module attributes {stable_mosaic.version = 11 : i64} {
  func.func @_gemm_bias_kernel(%arg0: i32, %arg1: i32, %arg2: memref<512x36xf32, #tpu.memory_space<vmem>>, %arg3: memref<36x128xf32, #tpu.memory_space<vmem>>, %arg4: memref<1x128xf32, #tpu.memory_space<vmem>>, %arg5: memref<512x128xf32, #tpu.memory_space<vmem>>) attributes {dimension_semantics = [#tpu.dimension_semantics<parallel>, #tpu.dimension_semantics<parallel>], iteration_bounds = array<i64: 1, 1>, scalar_prefetch = 0 : i64, scratch_operands = 0 : i64, tpu.core_type = #tpu.core_type<tc>, window_params = [{transform_indices = @transform_0, window_bounds = array<i64: 512, 36>}, {transform_indices = @transform_1, window_bounds = array<i64: 36, 128>}, {transform_indices = @transform_2, window_bounds = array<i64: 1, 128>}, {transform_indices = @transform_3, window_bounds = array<i64: 512, 128>}]} {
    %c0 = arith.constant 0 : index
    %c0_0 = arith.constant 0 : index
    %0 = vector.load %arg2[%c0, %c0_0] : memref<512x36xf32, #tpu.memory_space<vmem>>, vector<512x36xf32>
    %c0_1 = arith.constant 0 : index
    %c0_2 = arith.constant 0 : index
    %1 = vector.load %arg3[%c0_1, %c0_2] : memref<36x128xf32, #tpu.memory_space<vmem>>, vector<36x128xf32>
    %cst = arith.constant dense<0.000000e+00> : vector<512x128xf32>
    %2 = tpu.matmul %0, %1, %cst {dimension_numbers = #tpu.dot_dimension_numbers<[1], [0], [0], [1], [0, 0, 1, 1], [], []>} : vector<512x36xf32>, vector<36x128xf32>, vector<512x128xf32> -> vector<512x128xf32>
    %c0_3 = arith.constant 0 : index
    %c0_4 = arith.constant 0 : index
    %3 = vector.load %arg4[%c0_3, %c0_4] : memref<1x128xf32, #tpu.memory_space<vmem>>, vector<1x128xf32>
    %4 = vector.broadcast %3 : vector<1x128xf32> to vector<512x128xf32>
    %5 = arith.addf %2, %4 : vector<512x128xf32>
    %c0_5 = arith.constant 0 : index
    %c0_6 = arith.constant 0 : index
    %6 = vector.load %arg5[%c0_5, %c0_6] : memref<512x128xf32, #tpu.memory_space<vmem>>, vector<512x128xf32>
    tpu.vector_store %arg5[%c0_5, %c0_6], %5 {strides = array<i32>} : memref<512x128xf32, #tpu.memory_space<vmem>>, vector<512x128xf32>,
    return
  }
  func.func @transform_0(%arg0: i32, %arg1: i32) -> (i32, i32) {
    %c0_i32 = arith.constant 0 : i32
    %c0_i32_0 = arith.constant 0 : i32
    return %arg0, %c0_i32 : i32, i32
  }
  func.func @transform_1(%arg0: i32, %arg1: i32) -> (i32, i32) {
    %c0_i32 = arith.constant 0 : i32
    %c0_i32_0 = arith.constant 0 : i32
    return %c0_i32, %arg1 : i32, i32
  }
  func.func @transform_2(%arg0: i32, %arg1: i32) -> (i32, i32) {
    %c0_i32 = arith.constant 0 : i32
    %c0_i32_0 = arith.constant 0 : i32
    return %c0_i32, %arg1 : i32, i32
  }
  func.func @transform_3(%arg0: i32, %arg1: i32) -> (i32, i32) {
    %c0_i32 = arith.constant 0 : i32
    return %arg0, %arg1 : i32, i32
  }
}

</mosaic_0001>

<llo_original>
// kernel: tpu_custom_call.1
$region0: #{tpu_custom_call.1}
  #allocation0 [shape = 'u32[]', space=smem, size = 0x4, offset = 0x4, fixed_abs, tag = 'smem constant byte address 0x4 - core index']
  #allocation1 [shape = 'u32[144,128]{1,0:T(1,128)}', space=vmem, size = 0x12000, scoped, tag = 'internal scratch']
  %s0 = inlined_call_operand.vmem [shape: f32[512,36], index: 0, kind: input, shape index: {}]
  %s1 = inlined_call_operand.vmem [shape: f32[36,128], index: 1, kind: input, shape index: {}]
  %s2 = inlined_call_operand.vmem [shape: f32[1,128], index: 2, kind: input, shape index: {}]
  %s3 = inlined_call_operand.hbm [shape: f32[512,128], index: 3, kind: output, shape index: {}]
  %s4 = sld [smem:[#allocation0]]
  $region22: #{tpu_custom_call.1} parent=0
    _
  %s6 = ssub.s32 1, %s4
  %s7 = scalar_select 0, %s6, %s4
  $region1: #{tpu_custom_call.1} parent=0
    #allocation2 [shape = 'u8[262144]{0}', space=vmem, size = 0x40000, scoped, tag = 'output window, operand 0, single buffered']
    #allocation3 [shape = 's32[1]{0}', space=sflag, size = 0x4, scoped, tag = 'scoped memory for tpu_custom_call.1']
    %8 = vsyncpa [#allocation3], 0
    // Predicated region
    $region2: #{tpu_custom_call.1} parent=1 // pred_check
      _
    $region3: #{tpu_custom_call.1} parent=1 // pred_check_branch
      %10 = sbr.rel (0) target = $region5
    $region4: #{tpu_custom_call.1} parent=1 // pred_region
      _
    $region5: #{tpu_custom_call.1} parent=1 // pred_fallthru
      _
    // Predicated region
    $region6: #{tpu_custom_call.1} parent=1 // pred_check
      _
    $region7: #{tpu_custom_call.1} parent=1 // pred_check_branch
      %12 = sbr.rel (0) target = $region9
    $region8: #{tpu_custom_call.1} parent=1 // pred_region
      _
    $region9: #{tpu_custom_call.1} parent=1 // pred_fallthru
      _
    // Predicated region
    $region10: #{tpu_custom_call.1} parent=1 // pred_check
      _
    $region11: #{tpu_custom_call.1} parent=1 // pred_check_branch
      %14 = sbr.rel (0) target = $region13
    $region12: #{tpu_custom_call.1} parent=1 // pred_region
      _
    $region13: #{tpu_custom_call.1} parent=1 // pred_fallthru
      _
    %v15 = vld [vmem:[%s0] sm:$0xff]
    %v16 = vld [vmem:[%s0 + $0x8] sm:$0xff]
    %v17 = vld [vmem:[%s0 + $0x10] sm:$0xff]
    %v18 = vld [vmem:[%s0 + $0x18] sm:$0xff]
    %v19 = vld [vmem:[%s0 + $0x20] sm:$0xff]
    %v20 = vld [vmem:[%s0 + $0x28] sm:$0xff]
    %v21 = vld [vmem:[%s0 + $0x30] sm:$0xff]
    %v22 = vld [vmem:[%s0 + $0x38] sm:$0xff]
    %v23 = vld [vmem:[%s0 + $0x40] sm:$0xff]
    %v24 = vld [vmem:[%s0 + $0x48] sm:$0xff]
    %v25 = vld [vmem:[%s0 + $0x50] sm:$0xff]
    %v26 = vld [vmem:[%s0 + $0x58] sm:$0xff]
    %v27 = vld [vmem:[%s0 + $0x60] sm:$0xff]
    %v28 = vld [vmem:[%s0 + $0x68] sm:$0xff]
    %v29 = vld [vmem:[%s0 + $0x70] sm:$0xff]
    %v30 = vld [vmem:[%s0 + $0x78] sm:$0xff]
    %v31 = vld [vmem:[%s0 + $0x80] sm:$0xff]
    %v32 = vld [vmem:[%s0 + $0x88] sm:$0xff]
    %v33 = vld [vmem:[%s0 + $0x90] sm:$0xff]
    %v34 = vld [vmem:[%s0 + $0x98] sm:$0xff]
    %v35 = vld [vmem:[%s0 + $0xa0] sm:$0xff]
    %v36 = vld [vmem:[%s0 + $0xa8] sm:$0xff]
    %v37 = vld [vmem:[%s0 + $0xb0] sm:$0xff]
    %v38 = vld [vmem:[%s0 + $0xb8] sm:$0xff]
    %v39 = vld [vmem:[%s0 + $0xc0] sm:$0xff]
    %v40 = vld [vmem:[%s0 + $0xc8] sm:$0xff]
    %v41 = vld [vmem:[%s0 + $0xd0] sm:$0xff]
    %v42 = vld [vmem:[%s0 + $0xd8] sm:$0xff]
    %v43 = vld [vmem:[%s0 + $0xe0] sm:$0xff]
    %v44 = vld [vmem:[%s0 + $0xe8] sm:$0xff]
    %v45 = vld [vmem:[%s0 + $0xf0] sm:$0xff]
    %v46 = vld [vmem:[%s0 + $0xf8] sm:$0xff]
    %v47 = vld [vmem:[%s0 + $0x100] sm:$0xff]
    %v48 = vld [vmem:[%s0 + $0x108] sm:$0xff]
    %v49 = vld [vmem:[%s0 + $0x110] sm:$0xff]
    %v50 = vld [vmem:[%s0 + $0x118] sm:$0xff]
    %v51 = vld [vmem:[%s0 + $0x120] sm:$0xff]
    %v52 = vld [vmem:[%s0 + $0x128] sm:$0xff]
    %v53 = vld [vmem:[%s0 + $0x130] sm:$0xff]
    %v54 = vld [vmem:[%s0 + $0x138] sm:$0xff]
    %v55 = vld [vmem:[%s0 + $0x140] sm:$0xff]
    %v56 = vld [vmem:[%s0 + $0x148] sm:$0xff]
    %v57 = vld [vmem:[%s0 + $0x150] sm:$0xff]
    %v58 = vld [vmem:[%s0 + $0x158] sm:$0xff]
    %v59 = vld [vmem:[%s0 + $0x160] sm:$0xff]
    %v60 = vld [vmem:[%s0 + $0x168] sm:$0xff]
    %v61 = vld [vmem:[%s0 + $0x170] sm:$0xff]
    %v62 = vld [vmem:[%s0 + $0x178] sm:$0xff]
    %v63 = vld [vmem:[%s0 + $0x180] sm:$0xff]
    %v64 = vld [vmem:[%s0 + $0x188] sm:$0xff]
    %v65 = vld [vmem:[%s0 + $0x190] sm:$0xff]
    %v66 = vld [vmem:[%s0 + $0x198] sm:$0xff]
    %v67 = vld [vmem:[%s0 + $0x1a0] sm:$0xff]
    %v68 = vld [vmem:[%s0 + $0x1a8] sm:$0xff]
    %v69 = vld [vmem:[%s0 + $0x1b0] sm:$0xff]
    %v70 = vld [vmem:[%s0 + $0x1b8] sm:$0xff]
    %v71 = vld [vmem:[%s0 + $0x1c0] sm:$0xff]
    %v72 = vld [vmem:[%s0 + $0x1c8] sm:$0xff]
    %v73 = vld [vmem:[%s0 + $0x1d0] sm:$0xff]
    %v74 = vld [vmem:[%s0 + $0x1d8] sm:$0xff]
    %v75 = vld [vmem:[%s0 + $0x1e0] sm:$0xff]
    %v76 = vld [vmem:[%s0 + $0x1e8] sm:$0xff]
    %v77 = vld [vmem:[%s0 + $0x1f0] sm:$0xff]
    %v78 = vld [vmem:[%s0 + $0x1f8] sm:$0xff]
    %v79 = vld [vmem:[%s1] sm:$0xff]
    %v80 = vld [vmem:[%s1 + $0x8] sm:$0xff]
    %v81 = vld [vmem:[%s1 + $0x10] sm:$0xff]
    %v82 = vld [vmem:[%s1 + $0x18] sm:$0xff]
    %v83 = vld [vmem:[%s1 + $0x20] sm:$0xf]
    %v84 = vld [vmem:[%s2] sm:$0x1]
    %v86 = vlaneseq
    %v87 = vshrl.u32 %v86, 7
    %v88 = vsub.s32 0, %v87
    %v89 = vrot.slane %v84, %v88
    %vm91 = vcmask 293888
    %v93 = vsel %vm91, %v15, 0
    %v96 = vsel %vm91, %v16, 0
    %v99 = vsel %vm91, %v17, 0
    %v102 = vsel %vm91, %v18, 0
    %v105 = vsel %vm91, %v19, 0
    %v108 = vsel %vm91, %v20, 0
    %v111 = vsel %vm91, %v21, 0
    %v114 = vsel %vm91, %v22, 0
    %v117 = vsel %vm91, %v23, 0
    %v120 = vsel %vm91, %v24, 0
    %v123 = vsel %vm91, %v25, 0
    %v126 = vsel %vm91, %v26, 0
    %v129 = vsel %vm91, %v27, 0
    %v132 = vsel %vm91, %v28, 0
    %v135 = vsel %vm91, %v29, 0
    %v138 = vsel %vm91, %v30, 0
    %v141 = vsel %vm91, %v31, 0
    %v144 = vsel %vm91, %v32, 0
    %v147 = vsel %vm91, %v33, 0
    %v150 = vsel %vm91, %v34, 0
    %v153 = vsel %vm91, %v35, 0
    %v156 = vsel %vm91, %v36, 0
    %v159 = vsel %vm91, %v37, 0
    %v162 = vsel %vm91, %v38, 0
    %v165 = vsel %vm91, %v39, 0
    %v168 = vsel %vm91, %v40, 0
    %v171 = vsel %vm91, %v41, 0
    %v174 = vsel %vm91, %v42, 0
    %v177 = vsel %vm91, %v43, 0
    %v180 = vsel %vm91, %v44, 0
    %v183 = vsel %vm91, %v45, 0
    %v186 = vsel %vm91, %v46, 0
    %v189 = vsel %vm91, %v47, 0
    %v192 = vsel %vm91, %v48, 0
    %v195 = vsel %vm91, %v49, 0
    %v198 = vsel %vm91, %v50, 0
    %v201 = vsel %vm91, %v51, 0
    %v204 = vsel %vm91, %v52, 0
    %v207 = vsel %vm91, %v53, 0
    %v210 = vsel %vm91, %v54, 0
    %v213 = vsel %vm91, %v55, 0
    %v216 = vsel %vm91, %v56, 0
    %v219 = vsel %vm91, %v57, 0
    %v222 = vsel %vm91, %v58, 0
    %v225 = vsel %vm91, %v59, 0
    %v228 = vsel %vm91, %v60, 0
    %v231 = vsel %vm91, %v61, 0
    %v234 = vsel %vm91, %v62, 0
    %v237 = vsel %vm91, %v63, 0
    %v240 = vsel %vm91, %v64, 0
    %v243 = vsel %vm91, %v65, 0
    %v246 = vsel %vm91, %v66, 0
    %v249 = vsel %vm91, %v67, 0
    %v252 = vsel %vm91, %v68, 0
    %v255 = vsel %vm91, %v69, 0
    %v258 = vsel %vm91, %v70, 0
    %v261 = vsel %vm91, %v71, 0
    %v264 = vsel %vm91, %v72, 0
    %v267 = vsel %vm91, %v73, 0
    %v270 = vsel %vm91, %v74, 0
    %v273 = vsel %vm91, %v75, 0
    %v276 = vsel %vm91, %v76, 0
    %v279 = vsel %vm91, %v77, 0
    %v282 = vsel %vm91, %v78, 0
    %vm284 = vcmask 1043456
    %v286 = vsel %vm284, %v83, 0
    %288 = vmatprep.subr.mxu0 0.0
    %289 = vmatpush1.msra.mxu0 0.0
    %290 = vmatprep.subr.mxu0 0.0
    %291 = vmatpush1.msra.mxu0 0.0
    %292 = vmatprep.subr.mxu0 0.0
    %293 = vmatpush1.msra.mxu0 0.0
    %294 = vmatprep.subr.mxu0 0.0
    %295 = vmatpush1.msra.mxu0 0.0
    %296 = vmatprep.subr.mxu0 0.0
    %297 = vmatpush1.msra.mxu0 0.0
    %298 = vmatprep.subr.mxu0 0.0
    %299 = vmatpush1.msra.mxu0 0.0
    %300 = vmatprep.subr.mxu0 0.0
    %301 = vmatpush1.msra.mxu0 0.0
    %302 = vmatprep.subr.mxu0 0.0
    %303 = vmatpush1.msra.mxu0 0.0
    %304 = vmatprep.subr.mxu0 0.0
    %305 = vmatpush1.msra.mxu0 0.0
    %306 = vmatprep.subr.mxu0 0.0
    %307 = vmatpush1.msra.mxu0 0.0
    %308 = vmatprep.subr.mxu0 0.0
    %309 = vmatpush1.msra.mxu0 0.0
    %310 = vmatprep.subr.mxu0 0.0
    %311 = vmatpush1.msra.mxu0 %v286
    %312 = vmatprep.subr.mxu0 0.0
    %313 = vmatpush1.msra.mxu0 %v82
    %314 = vmatprep.subr.mxu0 0.0
    %315 = vmatpush1.msra.mxu0 %v81
    %316 = vmatprep.subr.mxu0 0.0
    %317 = vmatpush1.msra.mxu0 %v80
    %318 = vmatprep.subr.mxu0 0.0
    %319 = vmatpush1.msra.mxu0 %v79
    %320 = vmatprep.subr.mxu0 0.0
    %321 = vmatpush2.msra.mxu0 0.0
    %322 = vmatprep.subr.mxu0 0.0
    %323 = vmatpush2.msra.mxu0 0.0
    %324 = vmatprep.subr.mxu0 0.0
    %325 = vmatpush2.msra.mxu0 0.0
    %326 = vmatprep.subr.mxu0 0.0
    %327 = vmatpush2.msra.mxu0 0.0
    %328 = vmatprep.subr.mxu0 0.0
    %329 = vmatpush2.msra.mxu0 0.0
    %330 = vmatprep.subr.mxu0 0.0
    %331 = vmatpush2.msra.mxu0 0.0
    %332 = vmatprep.subr.mxu0 0.0
    %333 = vmatpush2.msra.mxu0 0.0
    %334 = vmatprep.subr.mxu0 0.0
    %335 = vmatpush2.msra.mxu0 0.0
    %336 = vmatprep.subr.mxu0 0.0
    %337 = vmatpush2.msra.mxu0 0.0
    %338 = vmatprep.subr.mxu0 0.0
    %339 = vmatpush2.msra.mxu0 0.0
    %340 = vmatprep.subr.mxu0 0.0
    %341 = vmatpush2.msra.mxu0 0.0
    %342 = vmatprep.subr.mxu0 0.0
    %343 = vmatpush2.msra.mxu0 0.0
    %344 = vmatprep.subr.mxu0 0.0
    %345 = vmatpush2.msra.mxu0 0.0
    %346 = vmatprep.subr.mxu0 0.0
    %347 = vmatpush2.msra.mxu0 0.0
    %348 = vmatprep.subr.mxu0 0.0
    %349 = vmatpush2.msra.mxu0 0.0
    %350 = vmatprep.subr.mxu0 0.0
    %351 = vmatpush2.msra.mxu0 0.0
    %352 = vmatprep.mubr.f32.mxu0 0.0
    %353 = vmatmul.mubr.f32.gmra.mxu0 %v93
    %v354 = vpop.f32.mrf.mxu0
    %v355 = vadd.f32 %v89, %v354
    %v356 = vpop.f32.mrf.mxu0
    %357 = vmatprep.mubr.f32.mxu0 0.0
    %358 = vmatmul.mubr.f32.gmra.mxu0 %v96
    %v359 = vpop.f32.mrf.mxu0
    %v360 = vadd.f32 %v89, %v359
    %v361 = vpop.f32.mrf.mxu0
    %362 = vmatprep.mubr.f32.mxu0 0.0
    %363 = vmatmul.mubr.f32.gmra.mxu0 %v99
    %v364 = vpop.f32.mrf.mxu0
    %v365 = vadd.f32 %v89, %v364
    %v366 = vpop.f32.mrf.mxu0
    %367 = vmatprep.mubr.f32.mxu0 0.0
    %368 = vmatmul.mubr.f32.gmra.mxu0 %v102
    %v369 = vpop.f32.mrf.mxu0
    %v370 = vadd.f32 %v89, %v369
    %v371 = vpop.f32.mrf.mxu0
    %372 = vmatprep.mubr.f32.mxu0 0.0
    %373 = vmatmul.mubr.f32.gmra.mxu0 %v105
    %v374 = vpop.f32.mrf.mxu0
    %v375 = vadd.f32 %v89, %v374
    %v376 = vpop.f32.mrf.mxu0
    %377 = vmatprep.mubr.f32.mxu0 0.0
    %378 = vmatmul.mubr.f32.gmra.mxu0 %v108
    %v379 = vpop.f32.mrf.mxu0
    %v380 = vadd.f32 %v89, %v379
    %v381 = vpop.f32.mrf.mxu0
    %382 = vmatprep.mubr.f32.mxu0 0.0
    %383 = vmatmul.mubr.f32.gmra.mxu0 %v111
    %v384 = vpop.f32.mrf.mxu0
    %v385 = vadd.f32 %v89, %v384
    %v386 = vpop.f32.mrf.mxu0
    %387 = vmatprep.mubr.f32.mxu0 0.0
    %388 = vmatmul.mubr.f32.gmra.mxu0 %v114
    %v389 = vpop.f32.mrf.mxu0
    %v390 = vadd.f32 %v89, %v389
    %v391 = vpop.f32.mrf.mxu0
    %392 = vmatprep.mubr.f32.mxu0 0.0
    %393 = vmatmul.mubr.f32.gmra.mxu0 %v117
    %v394 = vpop.f32.mrf.mxu0
    %v395 = vadd.f32 %v89, %v394
    %v396 = vpop.f32.mrf.mxu0
    %397 = vmatprep.mubr.f32.mxu0 0.0
    %398 = vmatmul.mubr.f32.gmra.mxu0 %v120
    %v399 = vpop.f32.mrf.mxu0
    %v400 = vadd.f32 %v89, %v399
    %v401 = vpop.f32.mrf.mxu0
    %402 = vmatprep.mubr.f32.mxu0 0.0
    %403 = vmatmul.mubr.f32.gmra.mxu0 %v123
    %v404 = vpop.f32.mrf.mxu0
    %v405 = vadd.f32 %v89, %v404
    %v406 = vpop.f32.mrf.mxu0
    %407 = vmatprep.mubr.f32.mxu0 0.0
    %408 = vmatmul.mubr.f32.gmra.mxu0 %v126
    %v409 = vpop.f32.mrf.mxu0
    %v410 = vadd.f32 %v89, %v409
    %v411 = vpop.f32.mrf.mxu0
    %412 = vmatprep.mubr.f32.mxu0 0.0
    %413 = vmatmul.mubr.f32.gmra.mxu0 %v129
    %v414 = vpop.f32.mrf.mxu0
    %v415 = vadd.f32 %v89, %v414
    %v416 = vpop.f32.mrf.mxu0
    %417 = vmatprep.mubr.f32.mxu0 0.0
    %418 = vmatmul.mubr.f32.gmra.mxu0 %v132
    %v419 = vpop.f32.mrf.mxu0
    %v420 = vadd.f32 %v89, %v419
    %v421 = vpop.f32.mrf.mxu0
    %422 = vmatprep.mubr.f32.mxu0 0.0
    %423 = vmatmul.mubr.f32.gmra.mxu0 %v135
    %v424 = vpop.f32.mrf.mxu0
    %v425 = vadd.f32 %v89, %v424
    %v426 = vpop.f32.mrf.mxu0
    %427 = vmatprep.mubr.f32.mxu0 0.0
    %428 = vmatmul.mubr.f32.gmra.mxu0 %v138
    %v429 = vpop.f32.mrf.mxu0
    %v430 = vadd.f32 %v89, %v429
    %v431 = vpop.f32.mrf.mxu0
    %432 = vmatprep.mubr.f32.mxu0 0.0
    %433 = vmatmul.mubr.f32.gmra.mxu0 %v141
    %v434 = vpop.f32.mrf.mxu0
    %v435 = vadd.f32 %v89, %v434
    %v436 = vpop.f32.mrf.mxu0
    %437 = vmatprep.mubr.f32.mxu0 0.0
    %438 = vmatmul.mubr.f32.gmra.mxu0 %v144
    %v439 = vpop.f32.mrf.mxu0
    %v440 = vadd.f32 %v89, %v439
    %v441 = vpop.f32.mrf.mxu0
    %442 = vmatprep.mubr.f32.mxu0 0.0
    %443 = vmatmul.mubr.f32.gmra.mxu0 %v147
    %v444 = vpop.f32.mrf.mxu0
    %v445 = vadd.f32 %v89, %v444
    %v446 = vpop.f32.mrf.mxu0
    %447 = vmatprep.mubr.f32.mxu0 0.0
    %448 = vmatmul.mubr.f32.gmra.mxu0 %v150
    %v449 = vpop.f32.mrf.mxu0
    %v450 = vadd.f32 %v89, %v449
    %v451 = vpop.f32.mrf.mxu0
    %452 = vmatprep.mubr.f32.mxu0 0.0
    %453 = vmatmul.mubr.f32.gmra.mxu0 %v153
    %v454 = vpop.f32.mrf.mxu0
    %v455 = vadd.f32 %v89, %v454
    %v456 = vpop.f32.mrf.mxu0
    %457 = vmatprep.mubr.f32.mxu0 0.0
    %458 = vmatmul.mubr.f32.gmra.mxu0 %v156
    %v459 = vpop.f32.mrf.mxu0
    %v460 = vadd.f32 %v89, %v459
    %v461 = vpop.f32.mrf.mxu0
    %462 = vmatprep.mubr.f32.mxu0 0.0
    %463 = vmatmul.mubr.f32.gmra.mxu0 %v159
    %v464 = vpop.f32.mrf.mxu0
    %v465 = vadd.f32 %v89, %v464
    %v466 = vpop.f32.mrf.mxu0
    %467 = vmatprep.mubr.f32.mxu0 0.0
    %468 = vmatmul.mubr.f32.gmra.mxu0 %v162
    %v469 = vpop.f32.mrf.mxu0
    %v470 = vadd.f32 %v89, %v469
    %v471 = vpop.f32.mrf.mxu0
    %472 = vmatprep.mubr.f32.mxu0 0.0
    %473 = vmatmul.mubr.f32.gmra.mxu0 %v165
    %v474 = vpop.f32.mrf.mxu0
    %v475 = vadd.f32 %v89, %v474
    %v476 = vpop.f32.mrf.mxu0
    %477 = vmatprep.mubr.f32.mxu0 0.0
    %478 = vmatmul.mubr.f32.gmra.mxu0 %v168
    %v479 = vpop.f32.mrf.mxu0
    %v480 = vadd.f32 %v89, %v479
    %v481 = vpop.f32.mrf.mxu0
    %482 = vmatprep.mubr.f32.mxu0 0.0
    %483 = vmatmul.mubr.f32.gmra.mxu0 %v171
    %v484 = vpop.f32.mrf.mxu0
    %v485 = vadd.f32 %v89, %v484
    %v486 = vpop.f32.mrf.mxu0
    %487 = vmatprep.mubr.f32.mxu0 0.0
    %488 = vmatmul.mubr.f32.gmra.mxu0 %v174
    %v489 = vpop.f32.mrf.mxu0
    %v490 = vadd.f32 %v89, %v489
    %v491 = vpop.f32.mrf.mxu0
    %492 = vmatprep.mubr.f32.mxu0 0.0
    %493 = vmatmul.mubr.f32.gmra.mxu0 %v177
    %v494 = vpop.f32.mrf.mxu0
    %v495 = vadd.f32 %v89, %v494
    %v496 = vpop.f32.mrf.mxu0
    %497 = vmatprep.mubr.f32.mxu0 0.0
    %498 = vmatmul.mubr.f32.gmra.mxu0 %v180
    %v499 = vpop.f32.mrf.mxu0
    %v500 = vadd.f32 %v89, %v499
    %v501 = vpop.f32.mrf.mxu0
    %502 = vmatprep.mubr.f32.mxu0 0.0
    %503 = vmatmul.mubr.f32.gmra.mxu0 %v183
    %v504 = vpop.f32.mrf.mxu0
    %v505 = vadd.f32 %v89, %v504
    %v506 = vpop.f32.mrf.mxu0
    %507 = vmatprep.mubr.f32.mxu0 0.0
    %508 = vmatmul.mubr.f32.gmra.mxu0 %v186
    %v509 = vpop.f32.mrf.mxu0
    %v510 = vadd.f32 %v89, %v509
    %v511 = vpop.f32.mrf.mxu0
    %512 = vmatprep.mubr.f32.mxu0 0.0
    %513 = vmatmul.mubr.f32.gmra.mxu0 %v189
    %v514 = vpop.f32.mrf.mxu0
    %v515 = vadd.f32 %v89, %v514
    %v516 = vpop.f32.mrf.mxu0
    %517 = vmatprep.mubr.f32.mxu0 0.0
    %518 = vmatmul.mubr.f32.gmra.mxu0 %v192
    %v519 = vpop.f32.mrf.mxu0
    %v520 = vadd.f32 %v89, %v519
    %v521 = vpop.f32.mrf.mxu0
    %522 = vmatprep.mubr.f32.mxu0 0.0
    %523 = vmatmul.mubr.f32.gmra.mxu0 %v195
    %v524 = vpop.f32.mrf.mxu0
    %v525 = vadd.f32 %v89, %v524
    %v526 = vpop.f32.mrf.mxu0
    %527 = vmatprep.mubr.f32.mxu0 0.0
    %528 = vmatmul.mubr.f32.gmra.mxu0 %v198
    %v529 = vpop.f32.mrf.mxu0
    %v530 = vadd.f32 %v89, %v529
    %v531 = vpop.f32.mrf.mxu0
    %532 = vmatprep.mubr.f32.mxu0 0.0
    %533 = vmatmul.mubr.f32.gmra.mxu0 %v201
    %v534 = vpop.f32.mrf.mxu0
    %v535 = vadd.f32 %v89, %v534
    %v536 = vpop.f32.mrf.mxu0
    %537 = vmatprep.mubr.f32.mxu0 0.0
    %538 = vmatmul.mubr.f32.gmra.mxu0 %v204
    %v539 = vpop.f32.mrf.mxu0
    %v540 = vadd.f32 %v89, %v539
    %v541 = vpop.f32.mrf.mxu0
    %542 = vmatprep.mubr.f32.mxu0 0.0
    %543 = vmatmul.mubr.f32.gmra.mxu0 %v207
    %v544 = vpop.f32.mrf.mxu0
    %v545 = vadd.f32 %v89, %v544
    %v546 = vpop.f32.mrf.mxu0
    %547 = vmatprep.mubr.f32.mxu0 0.0
    %548 = vmatmul.mubr.f32.gmra.mxu0 %v210
    %v549 = vpop.f32.mrf.mxu0
    %v550 = vadd.f32 %v89, %v549
    %v551 = vpop.f32.mrf.mxu0
    %552 = vmatprep.mubr.f32.mxu0 0.0
    %553 = vmatmul.mubr.f32.gmra.mxu0 %v213
    %v554 = vpop.f32.mrf.mxu0
    %v555 = vadd.f32 %v89, %v554
    %v556 = vpop.f32.mrf.mxu0
    %557 = vmatprep.mubr.f32.mxu0 0.0
    %558 = vmatmul.mubr.f32.gmra.mxu0 %v216
    %v559 = vpop.f32.mrf.mxu0
    %v560 = vadd.f32 %v89, %v559
    %v561 = vpop.f32.mrf.mxu0
    %562 = vmatprep.mubr.f32.mxu0 0.0
    %563 = vmatmul.mubr.f32.gmra.mxu0 %v219
    %v564 = vpop.f32.mrf.mxu0
    %v565 = vadd.f32 %v89, %v564
    %v566 = vpop.f32.mrf.mxu0
    %567 = vmatprep.mubr.f32.mxu0 0.0
    %568 = vmatmul.mubr.f32.gmra.mxu0 %v222
    %v569 = vpop.f32.mrf.mxu0
    %v570 = vadd.f32 %v89, %v569
    %v571 = vpop.f32.mrf.mxu0
    %572 = vmatprep.mubr.f32.mxu0 0.0
    %573 = vmatmul.mubr.f32.gmra.mxu0 %v225
    %v574 = vpop.f32.mrf.mxu0
    %v575 = vadd.f32 %v89, %v574
    %v576 = vpop.f32.mrf.mxu0
    %577 = vmatprep.mubr.f32.mxu0 0.0
    %578 = vmatmul.mubr.f32.gmra.mxu0 %v228
    %v579 = vpop.f32.mrf.mxu0
    %v580 = vadd.f32 %v89, %v579
    %v581 = vpop.f32.mrf.mxu0
    %582 = vmatprep.mubr.f32.mxu0 0.0
    %583 = vmatmul.mubr.f32.gmra.mxu0 %v231
    %v584 = vpop.f32.mrf.mxu0
    %v585 = vadd.f32 %v89, %v584
    %v586 = vpop.f32.mrf.mxu0
    %587 = vmatprep.mubr.f32.mxu0 0.0
    %588 = vmatmul.mubr.f32.gmra.mxu0 %v234
    %v589 = vpop.f32.mrf.mxu0
    %v590 = vadd.f32 %v89, %v589
    %v591 = vpop.f32.mrf.mxu0
    %592 = vmatprep.mubr.f32.mxu0 0.0
    %593 = vmatmul.mubr.f32.gmra.mxu0 %v237
    %v594 = vpop.f32.mrf.mxu0
    %v595 = vadd.f32 %v89, %v594
    %v596 = vpop.f32.mrf.mxu0
    %597 = vmatprep.mubr.f32.mxu0 0.0
    %598 = vmatmul.mubr.f32.gmra.mxu0 %v240
    %v599 = vpop.f32.mrf.mxu0
    %v600 = vadd.f32 %v89, %v599
    %v601 = vpop.f32.mrf.mxu0
    %602 = vmatprep.mubr.f32.mxu0 0.0
    %603 = vmatmul.mubr.f32.gmra.mxu0 %v243
    %v604 = vpop.f32.mrf.mxu0
    %v605 = vadd.f32 %v89, %v604
    %v606 = vpop.f32.mrf.mxu0
    %607 = vmatprep.mubr.f32.mxu0 0.0
    %608 = vmatmul.mubr.f32.gmra.mxu0 %v246
    %v609 = vpop.f32.mrf.mxu0
    %v610 = vadd.f32 %v89, %v609
    %v611 = vpop.f32.mrf.mxu0
    %612 = vmatprep.mubr.f32.mxu0 0.0
    %613 = vmatmul.mubr.f32.gmra.mxu0 %v249
    %v614 = vpop.f32.mrf.mxu0
    %v615 = vadd.f32 %v89, %v614
    %v616 = vpop.f32.mrf.mxu0
    %617 = vmatprep.mubr.f32.mxu0 0.0
    %618 = vmatmul.mubr.f32.gmra.mxu0 %v252
    %v619 = vpop.f32.mrf.mxu0
    %v620 = vadd.f32 %v89, %v619
    %v621 = vpop.f32.mrf.mxu0
    %622 = vmatprep.mubr.f32.mxu0 0.0
    %623 = vmatmul.mubr.f32.gmra.mxu0 %v255
    %v624 = vpop.f32.mrf.mxu0
    %v625 = vadd.f32 %v89, %v624
    %v626 = vpop.f32.mrf.mxu0
    %627 = vmatprep.mubr.f32.mxu0 0.0
    %628 = vmatmul.mubr.f32.gmra.mxu0 %v258
    %v629 = vpop.f32.mrf.mxu0
    %v630 = vadd.f32 %v89, %v629
    %v631 = vpop.f32.mrf.mxu0
    %632 = vmatprep.mubr.f32.mxu0 0.0
    %633 = vmatmul.mubr.f32.gmra.mxu0 %v261
    %v634 = vpop.f32.mrf.mxu0
    %v635 = vadd.f32 %v89, %v634
    %v636 = vpop.f32.mrf.mxu0
    %637 = vmatprep.mubr.f32.mxu0 0.0
    %638 = vmatmul.mubr.f32.gmra.mxu0 %v264
    %v639 = vpop.f32.mrf.mxu0
    %v640 = vadd.f32 %v89, %v639
    %v641 = vpop.f32.mrf.mxu0
    %642 = vmatprep.mubr.f32.mxu0 0.0
    %643 = vmatmul.mubr.f32.gmra.mxu0 %v267
    %v644 = vpop.f32.mrf.mxu0
    %v645 = vadd.f32 %v89, %v644
    %v646 = vpop.f32.mrf.mxu0
    %647 = vmatprep.mubr.f32.mxu0 0.0
    %648 = vmatmul.mubr.f32.gmra.mxu0 %v270
    %v649 = vpop.f32.mrf.mxu0
    %v650 = vadd.f32 %v89, %v649
    %v651 = vpop.f32.mrf.mxu0
    %652 = vmatprep.mubr.f32.mxu0 0.0
    %653 = vmatmul.mubr.f32.gmra.mxu0 %v273
    %v654 = vpop.f32.mrf.mxu0
    %v655 = vadd.f32 %v89, %v654
    %v656 = vpop.f32.mrf.mxu0
    %657 = vmatprep.mubr.f32.mxu0 0.0
    %658 = vmatmul.mubr.f32.gmra.mxu0 %v276
    %v659 = vpop.f32.mrf.mxu0
    %v660 = vadd.f32 %v89, %v659
    %v661 = vpop.f32.mrf.mxu0
    %662 = vmatprep.mubr.f32.mxu0 0.0
    %663 = vmatmul.mubr.f32.gmra.mxu0 %v279
    %v664 = vpop.f32.mrf.mxu0
    %v665 = vadd.f32 %v89, %v664
    %v666 = vpop.f32.mrf.mxu0
    %667 = vmatprep.mubr.f32.mxu0 0.0
    %668 = vmatmul.mubr.f32.gmra.mxu0 %v282
    %v669 = vpop.f32.mrf.mxu0
    %v670 = vadd.f32 %v89, %v669
    %v671 = vpop.f32.mrf.mxu0
    %672 = vdwg.mxu0
    %673 = vst [vmem:[#allocation2] sm:$0xff] %v355
    %674 = vst [vmem:[#allocation2 + $0x8] sm:$0xff] %v360
    %675 = vst [vmem:[#allocation2 + $0x10] sm:$0xff] %v365
    %676 = vst [vmem:[#allocation2 + $0x18] sm:$0xff] %v370
    %677 = vst [vmem:[#allocation2 + $0x20] sm:$0xff] %v375
    %678 = vst [vmem:[#allocation2 + $0x28] sm:$0xff] %v380
    %679 = vst [vmem:[#allocation2 + $0x30] sm:$0xff] %v385
    %680 = vst [vmem:[#allocation2 + $0x38] sm:$0xff] %v390
    %681 = vst [vmem:[#allocation2 + $0x40] sm:$0xff] %v395
    %682 = vst [vmem:[#allocation2 + $0x48] sm:$0xff] %v400
    %683 = vst [vmem:[#allocation2 + $0x50] sm:$0xff] %v405
    %684 = vst [vmem:[#allocation2 + $0x58] sm:$0xff] %v410
    %685 = vst [vmem:[#allocation2 + $0x60] sm:$0xff] %v415
    %686 = vst [vmem:[#allocation2 + $0x68] sm:$0xff] %v420
    %687 = vst [vmem:[#allocation2 + $0x70] sm:$0xff] %v425
    %688 = vst [vmem:[#allocation2 + $0x78] sm:$0xff] %v430
    %689 = vst [vmem:[#allocation2 + $0x80] sm:$0xff] %v435
    %690 = vst [vmem:[#allocation2 + $0x88] sm:$0xff] %v440
    %691 = vst [vmem:[#allocation2 + $0x90] sm:$0xff] %v445
    %692 = vst [vmem:[#allocation2 + $0x98] sm:$0xff] %v450
    %693 = vst [vmem:[#allocation2 + $0xa0] sm:$0xff] %v455
    %694 = vst [vmem:[#allocation2 + $0xa8] sm:$0xff] %v460
    %695 = vst [vmem:[#allocation2 + $0xb0] sm:$0xff] %v465
    %696 = vst [vmem:[#allocation2 + $0xb8] sm:$0xff] %v470
    %697 = vst [vmem:[#allocation2 + $0xc0] sm:$0xff] %v475
    %698 = vst [vmem:[#allocation2 + $0xc8] sm:$0xff] %v480
    %699 = vst [vmem:[#allocation2 + $0xd0] sm:$0xff] %v485
    %700 = vst [vmem:[#allocation2 + $0xd8] sm:$0xff] %v490
    %701 = vst [vmem:[#allocation2 + $0xe0] sm:$0xff] %v495
    %702 = vst [vmem:[#allocation2 + $0xe8] sm:$0xff] %v500
    %703 = vst [vmem:[#allocation2 + $0xf0] sm:$0xff] %v505
    %704 = vst [vmem:[#allocation2 + $0xf8] sm:$0xff] %v510
    %705 = vst [vmem:[#allocation2 + $0x100] sm:$0xff] %v515
    %706 = vst [vmem:[#allocation2 + $0x108] sm:$0xff] %v520
    %707 = vst [vmem:[#allocation2 + $0x110] sm:$0xff] %v525
    %708 = vst [vmem:[#allocation2 + $0x118] sm:$0xff] %v530
    %709 = vst [vmem:[#allocation2 + $0x120] sm:$0xff] %v535
    %710 = vst [vmem:[#allocation2 + $0x128] sm:$0xff] %v540
    %711 = vst [vmem:[#allocation2 + $0x130] sm:$0xff] %v545
    %712 = vst [vmem:[#allocation2 + $0x138] sm:$0xff] %v550
    %713 = vst [vmem:[#allocation2 + $0x140] sm:$0xff] %v555
    %714 = vst [vmem:[#allocation2 + $0x148] sm:$0xff] %v560
    %715 = vst [vmem:[#allocation2 + $0x150] sm:$0xff] %v565
    %716 = vst [vmem:[#allocation2 + $0x158] sm:$0xff] %v570
    %717 = vst [vmem:[#allocation2 + $0x160] sm:$0xff] %v575
    %718 = vst [vmem:[#allocation2 + $0x168] sm:$0xff] %v580
    %719 = vst [vmem:[#allocation2 + $0x170] sm:$0xff] %v585
    %720 = vst [vmem:[#allocation2 + $0x178] sm:$0xff] %v590
    %721 = vst [vmem:[#allocation2 + $0x180] sm:$0xff] %v595
    %722 = vst [vmem:[#allocation2 + $0x188] sm:$0xff] %v600
    %723 = vst [vmem:[#allocation2 + $0x190] sm:$0xff] %v605
    %724 = vst [vmem:[#allocation2 + $0x198] sm:$0xff] %v610
    %725 = vst [vmem:[#allocation2 + $0x1a0] sm:$0xff] %v615
    %726 = vst [vmem:[#allocation2 + $0x1a8] sm:$0xff] %v620
    %727 = vst [vmem:[#allocation2 + $0x1b0] sm:$0xff] %v625
    %728 = vst [vmem:[#allocation2 + $0x1b8] sm:$0xff] %v630
    %729 = vst [vmem:[#allocation2 + $0x1c0] sm:$0xff] %v635
    %730 = vst [vmem:[#allocation2 + $0x1c8] sm:$0xff] %v640
    %731 = vst [vmem:[#allocation2 + $0x1d0] sm:$0xff] %v645
    %732 = vst [vmem:[#allocation2 + $0x1d8] sm:$0xff] %v650
    %733 = vst [vmem:[#allocation2 + $0x1e0] sm:$0xff] %v655
    %734 = vst [vmem:[#allocation2 + $0x1e8] sm:$0xff] %v660
    %735 = vst [vmem:[#allocation2 + $0x1f0] sm:$0xff] %v665
    %736 = vst [vmem:[#allocation2 + $0x1f8] sm:$0xff] %v670
    // Predicated region
    $region14: #{tpu_custom_call.1} parent=1 // pred_check
      _
    $region15: #{tpu_custom_call.1} parent=1 // pred_check_branch
      %738 = sbr.rel (0) target = $region17
    $region16: #{tpu_custom_call.1} parent=1 // pred_region
      %s740 = ssub.s32 8192, 8192
      %741 = vsyncadd [#allocation3], %s740
      %s742 = sshll.u32 [#allocation2], 4
      %s743 = int_to_ptr.vmem [resolvable:$true] %s742
      %748 = dma.vmem_to_hbm [thread:$0]  %s743, 8192, %s3, [#allocation3], 128, 128, 8
    $region17: #{tpu_custom_call.1} parent=1 // pred_fallthru
      _
    // Predicated region
    $region18: #{tpu_custom_call.1} parent=1 // pred_check
      _
    $region19: #{tpu_custom_call.1} parent=1 // pred_check_branch
      %750 = sbr.rel (0) target = $region21
    $region20: #{tpu_custom_call.1} parent=1 // pred_region
      %751 = dma.done [#allocation3], 8192
    $region21: #{tpu_custom_call.1} parent=1 // pred_fallthru
      _
    %752 = vsyncpa [#allocation3], 1

</llo_original>
